<compile_context>
chip_gen: v6e
topology: v6e:2x2x1
jax: 0.10.0
libtpu: 0.0.40
codegen_flags: <defaults>
</compile_context>

<pallas_src>
import jax
import jax.numpy as jnp
from jax.experimental import pallas as pl
from jax.experimental.pallas import tpu as pltpu


def _linear_relu_kernel(x_ref, w_ref, b_ref, o_ref):
    # x_ref: (TB, IN)  w_ref: (IN, OUT)  b_ref: (1, OUT)  o_ref: (TB, OUT)
    acc = jnp.dot(x_ref[...], w_ref[...], preferred_element_type=jnp.float32)
    acc = acc + b_ref[...]                       # bias broadcast over batch rows
    o_ref[...] = jnp.maximum(acc, 0.0).astype(o_ref.dtype)


def _choose_batch_tile(B):
    """Batch tile: multiple of 8, capped at 2048, >=2 grid steps for large B."""
    rb = ((B + 7) // 8) * 8
    if rb <= 1024:
        return rb                                 # small problem: one big tile
    # Large B: cap at 2048 rows but keep at least 2 grid steps so a
    # "parallel" batch axis can be sharded across TensorCores (v7x).
    half = ((pl.cdiv(B, 2) + 7) // 8) * 8
    return min(2048, half)


def linear_relu(x, w, b):
    """x: (B, 250) f32, w: (250, 50) f32 ([in, out] layout), b: (50,) f32 -> (B, 50) f32."""
    B, IN = x.shape
    OUT = w.shape[1]

    b2 = b.reshape(1, OUT)

    TB = _choose_batch_tile(B)
    grid = (pl.cdiv(B, TB),)

    cost = pl.CostEstimate(
        flops=2 * B * IN * OUT,
        transcendentals=0,
        bytes_accessed=4 * (B * IN + IN * OUT + OUT + B * OUT),
    )

    out = pl.pallas_call(
        _linear_relu_kernel,
        out_shape=jax.ShapeDtypeStruct((B, OUT), x.dtype),
        grid_spec=pltpu.PrefetchScalarGridSpec(
            num_scalar_prefetch=0,
            grid=grid,
            in_specs=[
                pl.BlockSpec((TB, IN), lambda i: (i, 0)),    # batch-tiled activations
                pl.BlockSpec((IN, OUT), lambda i: (0, 0)),   # weight: resident in VMEM
                pl.BlockSpec((1, OUT), lambda i: (0, 0)),    # bias: resident in VMEM
            ],
            out_specs=pl.BlockSpec((TB, OUT), lambda i: (i, 0)),
        ),
        compiler_params=pltpu.CompilerParams(
            dimension_semantics=("parallel",),   # batch tiles are independent
        ),
        cost_estimate=cost,
    )(x, w, b2)

    return out


def make_params(key, in_features=250, out_features=50, dtype=jnp.float32):
    # Deterministic init mimicking nn.Linear's uniform(-1/sqrt(in), 1/sqrt(in)).
    kw, kb = jax.random.split(key)
    bound = 1.0 / jnp.sqrt(jnp.asarray(in_features, dtype))
    w_out_in = jax.random.uniform(
        kw, (out_features, in_features), dtype, minval=-bound, maxval=bound
    )
    b = jax.random.uniform(
        kb, (out_features,), dtype, minval=-bound, maxval=bound
    )
    # Kernel uses [in, out] layout.
    return w_out_in.T, b


if __name__ == "__main__":
    key = jax.random.PRNGKey(0)
    k_x, k_p, k_x2 = jax.random.split(key, 3)

    B, IN, OUT = 8, 250, 50
    w, b = make_params(k_p, IN, OUT)

    # Small-shape check (B=8).
    x = jax.random.normal(k_x, (B, IN), jnp.float32)
    out = jax.block_until_ready(linear_relu(x, w, b))
    ref = jnp.maximum(x @ w + b, 0.0)
    assert out.shape == (B, OUT)
    assert jnp.allclose(out, ref, atol=2e-5, rtol=1e-5)

    # Ragged-batch check (B not a multiple of the tile) to exercise the
    # partially out-of-bounds last block path.
    B2 = 300
    x2 = jax.random.normal(k_x2, (B2, IN), jnp.float32)
    out2 = jax.block_until_ready(linear_relu(x2, w, b))
    ref2 = jnp.maximum(x2 @ w + b, 0.0)
    assert out2.shape == (B2, OUT)
    assert jnp.allclose(out2, ref2, atol=2e-5, rtol=1e-5)

    print("KERNEL_OK")
</pallas_src>

<mosaic_0001>
module attributes {stable_mosaic.version = 11 : i64} {
  func.func @_linear_relu_kernel(%arg0: i32, %arg1: memref<8x250xf32, #tpu.memory_space<vmem>>, %arg2: memref<250x50xf32, #tpu.memory_space<vmem>>, %arg3: memref<1x50xf32, #tpu.memory_space<vmem>>, %arg4: memref<8x50xf32, #tpu.memory_space<vmem>>) attributes {dimension_semantics = [#tpu.dimension_semantics<parallel>], iteration_bounds = array<i64: 1>, scalar_prefetch = 0 : i64, scratch_operands = 0 : i64, tpu.core_type = #tpu.core_type<tc>, window_params = [{transform_indices = @transform_0, window_bounds = array<i64: 8, 250>}, {pipeline_mode = #tpu.pipeline_mode<synchronous>, transform_indices = @transform_1, window_bounds = array<i64: 250, 50>}, {pipeline_mode = #tpu.pipeline_mode<synchronous>, transform_indices = @transform_2, window_bounds = array<i64: 1, 50>}, {transform_indices = @transform_3, window_bounds = array<i64: 8, 50>}]} {
    %c0 = arith.constant 0 : index
    %c0_0 = arith.constant 0 : index
    %0 = vector.load %arg1[%c0, %c0_0] : memref<8x250xf32, #tpu.memory_space<vmem>>, vector<8x250xf32>
    %c0_1 = arith.constant 0 : index
    %c0_2 = arith.constant 0 : index
    %1 = vector.load %arg2[%c0_1, %c0_2] : memref<250x50xf32, #tpu.memory_space<vmem>>, vector<250x50xf32>
    %cst = arith.constant dense<0.000000e+00> : vector<8x50xf32>
    %2 = tpu.matmul %0, %1, %cst {dimension_numbers = #tpu.dot_dimension_numbers<[1], [0], [0], [1], [0, 0, 1, 1], [], []>} : vector<8x250xf32>, vector<250x50xf32>, vector<8x50xf32> -> vector<8x50xf32>
    %c0_3 = arith.constant 0 : index
    %c0_4 = arith.constant 0 : index
    %3 = vector.load %arg3[%c0_3, %c0_4] : memref<1x50xf32, #tpu.memory_space<vmem>>, vector<1x50xf32>
    %4 = vector.broadcast %3 : vector<1x50xf32> to vector<8x50xf32>
    %5 = arith.addf %2, %4 : vector<8x50xf32>
    %cst_5 = arith.constant 0.000000e+00 : f32
    %6 = vector.broadcast %cst_5 : f32 to vector<8x50xf32>
    %7 = arith.maximumf %5, %6 : vector<8x50xf32>
    %c0_6 = arith.constant 0 : index
    %c0_7 = arith.constant 0 : index
    %8 = vector.load %arg4[%c0_6, %c0_7] : memref<8x50xf32, #tpu.memory_space<vmem>>, vector<8x50xf32>
    tpu.vector_store %arg4[%c0_6, %c0_7], %7 {strides = array<i32>} : memref<8x50xf32, #tpu.memory_space<vmem>>, vector<8x50xf32>,
    return
  }
  func.func @transform_0(%arg0: i32) -> (i32, i32) {
    %c0_i32 = arith.constant 0 : i32
    %c0_i32_0 = arith.constant 0 : i32
    return %arg0, %c0_i32 : i32, i32
  }
  func.func @transform_1(%arg0: i32) -> (i32, i32) {
    %c0_i32 = arith.constant 0 : i32
    %c0_i32_0 = arith.constant 0 : i32
    %c0_i32_1 = arith.constant 0 : i32
    return %c0_i32, %c0_i32_0 : i32, i32
  }
  func.func @transform_2(%arg0: i32) -> (i32, i32) {
    %c0_i32 = arith.constant 0 : i32
    %c0_i32_0 = arith.constant 0 : i32
    %c0_i32_1 = arith.constant 0 : i32
    return %c0_i32, %c0_i32_0 : i32, i32
  }
  func.func @transform_3(%arg0: i32) -> (i32, i32) {
    %c0_i32 = arith.constant 0 : i32
    %c0_i32_0 = arith.constant 0 : i32
    return %arg0, %c0_i32 : i32, i32
  }
}

</mosaic_0001>

<llo_original>
// kernel: tpu_custom_call.1
$region0: #{tpu_custom_call.1}
  #allocation0 [shape = 'u32[]', space=smem, size = 0x4, offset = 0x4, fixed_abs, tag = 'smem constant byte address 0x4 - core index']
  #allocation1 [shape = 'u32[144,128]{1,0:T(1,128)}', space=vmem, size = 0x12000, scoped, tag = 'internal scratch']
  %s0 = inlined_call_operand.vmem [shape: f32[8,250], index: 0, kind: input, shape index: {}]
  %s1 = inlined_call_operand.vmem [shape: f32[250,50], index: 1, kind: input, shape index: {}]
  %s2 = inlined_call_operand.vmem [shape: f32[1,50], index: 2, kind: input, shape index: {}]
  %s3 = inlined_call_operand.hbm [shape: f32[8,50], index: 3, kind: output, shape index: {}]
  %s4 = sld [smem:[#allocation0]]
  $region22: #{tpu_custom_call.1} parent=0
    _
  %s6 = ssub.s32 1, %s4
  %s7 = scalar_select 0, %s6, %s4
  $region1: #{tpu_custom_call.1} parent=0
    #allocation2 [shape = 'u8[4096]{0}', space=vmem, size = 0x1000, scoped, tag = 'output window, operand 0, single buffered']
    #allocation3 [shape = 's32[1]{0}', space=sflag, size = 0x4, scoped, tag = 'scoped memory for tpu_custom_call.1']
    %8 = vsyncpa [#allocation3], 0
    // Predicated region
    $region2: #{tpu_custom_call.1} parent=1 // pred_check
      _
    $region3: #{tpu_custom_call.1} parent=1 // pred_check_branch
      %10 = sbr.rel (0) target = $region5
    $region4: #{tpu_custom_call.1} parent=1 // pred_region
      _
    $region5: #{tpu_custom_call.1} parent=1 // pred_fallthru
      _
    // Predicated region
    $region6: #{tpu_custom_call.1} parent=1 // pred_check
      _
    $region7: #{tpu_custom_call.1} parent=1 // pred_check_branch
      %12 = sbr.rel (0) target = $region9
    $region8: #{tpu_custom_call.1} parent=1 // pred_region
      _
    $region9: #{tpu_custom_call.1} parent=1 // pred_fallthru
      _
    // Predicated region
    $region10: #{tpu_custom_call.1} parent=1 // pred_check
      _
    $region11: #{tpu_custom_call.1} parent=1 // pred_check_branch
      %14 = sbr.rel (0) target = $region13
    $region12: #{tpu_custom_call.1} parent=1 // pred_region
      _
    $region13: #{tpu_custom_call.1} parent=1 // pred_fallthru
      _
    %v15 = vld [vmem:[%s0] sm:$0xff]
    %v16 = vld [vmem:[%s0 + $0x8] sm:$0xff]
    %v17 = vld [vmem:[%s1] sm:$0xff]
    %v18 = vld [vmem:[%s1 + $0x8] sm:$0xff]
    %v19 = vld [vmem:[%s1 + $0x10] sm:$0xff]
    %v20 = vld [vmem:[%s1 + $0x18] sm:$0xff]
    %v21 = vld [vmem:[%s1 + $0x20] sm:$0xff]
    %v22 = vld [vmem:[%s1 + $0x28] sm:$0xff]
    %v23 = vld [vmem:[%s1 + $0x30] sm:$0xff]
    %v24 = vld [vmem:[%s1 + $0x38] sm:$0xff]
    %v25 = vld [vmem:[%s1 + $0x40] sm:$0xff]
    %v26 = vld [vmem:[%s1 + $0x48] sm:$0xff]
    %v27 = vld [vmem:[%s1 + $0x50] sm:$0xff]
    %v28 = vld [vmem:[%s1 + $0x58] sm:$0xff]
    %v29 = vld [vmem:[%s1 + $0x60] sm:$0xff]
    %v30 = vld [vmem:[%s1 + $0x68] sm:$0xff]
    %v31 = vld [vmem:[%s1 + $0x70] sm:$0xff]
    %v32 = vld [vmem:[%s1 + $0x78] sm:$0xff]
    %v33 = vld [vmem:[%s1 + $0x80] sm:$0xff]
    %v34 = vld [vmem:[%s1 + $0x88] sm:$0xff]
    %v35 = vld [vmem:[%s1 + $0x90] sm:$0xff]
    %v36 = vld [vmem:[%s1 + $0x98] sm:$0xff]
    %v37 = vld [vmem:[%s1 + $0xa0] sm:$0xff]
    %v38 = vld [vmem:[%s1 + $0xa8] sm:$0xff]
    %v39 = vld [vmem:[%s1 + $0xb0] sm:$0xff]
    %v40 = vld [vmem:[%s1 + $0xb8] sm:$0xff]
    %v41 = vld [vmem:[%s1 + $0xc0] sm:$0xff]
    %v42 = vld [vmem:[%s1 + $0xc8] sm:$0xff]
    %v43 = vld [vmem:[%s1 + $0xd0] sm:$0xff]
    %v44 = vld [vmem:[%s1 + $0xd8] sm:$0xff]
    %v45 = vld [vmem:[%s1 + $0xe0] sm:$0xff]
    %v46 = vld [vmem:[%s1 + $0xe8] sm:$0xff]
    %v47 = vld [vmem:[%s1 + $0xf0] sm:$0xff]
    %v48 = vld [vmem:[%s1 + $0xf8] sm:$0x3]
    %v49 = vld [vmem:[%s2] sm:$0x1]
    %v51 = vlaneseq
    %v52 = vshrl.u32 %v51, 7
    %v53 = vsub.s32 0, %v52
    %v54 = vrot.slane %v49, %v53
    %vm56 = vcmask 998400
    %v58 = vsel %vm56, %v16, 0
    %vm60 = vcmask 1041408
    %v62 = vsel %vm60, %v48, 0
    %64 = vmatprep.subr.mxu0 0.0
    %65 = vmatpush1.msra.mxu0 %v32
    %66 = vmatprep.subr.mxu0 0.0
    %67 = vmatpush1.msra.mxu0 %v31
    %68 = vmatprep.subr.mxu0 0.0
    %69 = vmatpush1.msra.mxu0 %v30
    %70 = vmatprep.subr.mxu0 0.0
    %71 = vmatpush1.msra.mxu0 %v29
    %72 = vmatprep.subr.mxu0 0.0
    %73 = vmatpush1.msra.mxu0 %v28
    %74 = vmatprep.subr.mxu0 0.0
    %75 = vmatpush1.msra.mxu0 %v27
    %76 = vmatprep.subr.mxu0 0.0
    %77 = vmatpush1.msra.mxu0 %v26
    %78 = vmatprep.subr.mxu0 0.0
    %79 = vmatpush1.msra.mxu0 %v25
    %80 = vmatprep.subr.mxu0 0.0
    %81 = vmatpush1.msra.mxu0 %v24
    %82 = vmatprep.subr.mxu0 0.0
    %83 = vmatpush1.msra.mxu0 %v23
    %84 = vmatprep.subr.mxu0 0.0
    %85 = vmatpush1.msra.mxu0 %v22
    %86 = vmatprep.subr.mxu0 0.0
    %87 = vmatpush1.msra.mxu0 %v21
    %88 = vmatprep.subr.mxu0 0.0
    %89 = vmatpush1.msra.mxu0 %v20
    %90 = vmatprep.subr.mxu0 0.0
    %91 = vmatpush1.msra.mxu0 %v19
    %92 = vmatprep.subr.mxu0 0.0
    %93 = vmatpush1.msra.mxu0 %v18
    %94 = vmatprep.subr.mxu0 0.0
    %95 = vmatpush1.msra.mxu0 %v17
    %96 = vmatprep.subr.mxu0 0.0
    %97 = vmatpush2.msra.mxu0 %v62
    %98 = vmatprep.subr.mxu0 0.0
    %99 = vmatpush2.msra.mxu0 %v47
    %100 = vmatprep.subr.mxu0 0.0
    %101 = vmatpush2.msra.mxu0 %v46
    %102 = vmatprep.subr.mxu0 0.0
    %103 = vmatpush2.msra.mxu0 %v45
    %104 = vmatprep.subr.mxu0 0.0
    %105 = vmatpush2.msra.mxu0 %v44
    %106 = vmatprep.subr.mxu0 0.0
    %107 = vmatpush2.msra.mxu0 %v43
    %108 = vmatprep.subr.mxu0 0.0
    %109 = vmatpush2.msra.mxu0 %v42
    %110 = vmatprep.subr.mxu0 0.0
    %111 = vmatpush2.msra.mxu0 %v41
    %112 = vmatprep.subr.mxu0 0.0
    %113 = vmatpush2.msra.mxu0 %v40
    %114 = vmatprep.subr.mxu0 0.0
    %115 = vmatpush2.msra.mxu0 %v39
    %116 = vmatprep.subr.mxu0 0.0
    %117 = vmatpush2.msra.mxu0 %v38
    %118 = vmatprep.subr.mxu0 0.0
    %119 = vmatpush2.msra.mxu0 %v37
    %120 = vmatprep.subr.mxu0 0.0
    %121 = vmatpush2.msra.mxu0 %v36
    %122 = vmatprep.subr.mxu0 0.0
    %123 = vmatpush2.msra.mxu0 %v35
    %124 = vmatprep.subr.mxu0 0.0
    %125 = vmatpush2.msra.mxu0 %v34
    %126 = vmatprep.subr.mxu0 0.0
    %127 = vmatpush2.msra.mxu0 %v33
    %128 = vmatprep.mubr.f32.mxu0 %v58
    %129 = vmatmul.mubr.f32.gmra.mxu0 %v15
    %v130 = vpop.f32.mrf.mxu0
    %v131 = vadd.f32 %v54, %v130
    %v132 = vpop.f32.mrf.mxu0
    %133 = vdwg.mxu0
    %v134 = vmax.f32 %v131, 0.0
    %vm135 = vcmask 408576
    %136 = vst.msk [vmem:[#allocation2] sm:$0xff] %vm135, %v134
    // Predicated region
    $region14: #{tpu_custom_call.1} parent=1 // pred_check
      _
    $region15: #{tpu_custom_call.1} parent=1 // pred_check_branch
      %138 = sbr.rel (0) target = $region17
    $region16: #{tpu_custom_call.1} parent=1 // pred_region
      %s140 = ssub.s32 128, 128
      %141 = vsyncadd [#allocation3], %s140
      %s143 = sshll.u32 [#allocation2], 4
      %s144 = int_to_ptr.vmem [resolvable:$true] %s143
      %146 = dma.vmem_to_hbm [thread:$0]  %s144, 128, %s3, [#allocation3]
    $region17: #{tpu_custom_call.1} parent=1 // pred_fallthru
      _
    // Predicated region
    $region18: #{tpu_custom_call.1} parent=1 // pred_check
      _
    $region19: #{tpu_custom_call.1} parent=1 // pred_check_branch
      %148 = sbr.rel (0) target = $region21
    $region20: #{tpu_custom_call.1} parent=1 // pred_region
      %149 = dma.done [#allocation3], 128
    $region21: #{tpu_custom_call.1} parent=1 // pred_fallthru
      _
    %150 = vsyncpa [#allocation3], 1

</llo_original>
